<compile_context>
chip_gen: v6e
topology: v6e:2x2x1
jax: 0.10.0
libtpu: 0.0.40
codegen_flags: <defaults>
</compile_context>

<pallas_src>
import functools
import math

import jax
import jax.numpy as jnp
from jax import lax
from jax.experimental import pallas as pl
from jax.experimental.pallas import tpu as pltpu


def _qkv_projection_kernel(x_ref, w_ref, b_ref, o_ref):
    # x_ref: (1, tm, Dp); w_ref: (Dp, 3*Dp); b_ref: (1, 3*Dp); o_ref: (1, tm, 3*Dp)
    acc = jnp.dot(x_ref[0], w_ref[...], preferred_element_type=jnp.float32)
    acc = acc + b_ref[...].astype(jnp.float32)
    o_ref[0] = acc.astype(o_ref.dtype)


def _flash_attention_kernel(q_ref, k_ref, v_ref, o_ref,
                            m_scratch, l_scratch, acc_scratch):
    ki = pl.program_id(2)
    n_kv = pl.num_programs(2)

    @pl.when(ki == 0)
    def _init():
        m_scratch[...] = jnp.full(m_scratch.shape, -jnp.inf, m_scratch.dtype)
        l_scratch[...] = jnp.zeros_like(l_scratch)
        acc_scratch[...] = jnp.zeros_like(acc_scratch)

    q = q_ref[0]   # (tq, Dp) — already scaled by 1/sqrt(D) in the projection
    k = k_ref[0]   # (tk, Dp)
    v = v_ref[0]   # (tk, Dp)

    # Scores: contract the shared feature axis directly — no explicit k.T.
    s = lax.dot_general(
        q, k,
        dimension_numbers=(((1,), (1,)), ((), ())),
        preferred_element_type=jnp.float32)          # (tq, tk)

    # Online (flash-style) softmax update.
    m_prev = m_scratch[...]
    m_new = jnp.maximum(m_prev, jnp.max(s, axis=-1, keepdims=True))
    alpha = jnp.exp(m_prev - m_new)
    p = jnp.exp(s - m_new)
    l_scratch[...] = alpha * l_scratch[...] + jnp.sum(p, axis=-1, keepdims=True)
    acc_scratch[...] = alpha * acc_scratch[...] + jnp.dot(
        p.astype(v.dtype), v, preferred_element_type=jnp.float32)
    m_scratch[...] = m_new

    @pl.when(ki == n_kv - 1)
    def _finalize():
        # Normalize the (tq, Dp) accumulator (not the (tq, tk) prob matrix).
        inv_l = pl.reciprocal(l_scratch[...], approx=True)
        o_ref[0] = (acc_scratch[...] * inv_l).astype(o_ref.dtype)


def _pick_tile(s, target):
    """Largest tile <= target that divides s and is a multiple of 8 (or s)."""
    if s <= target:
        return s
    for t in range(min(target, s), 0, -1):
        if s % t == 0 and t % 8 == 0:
            return t
    return s


def self_attention(x, wq, bq, wk, bk, wv, bv, *,
                   q_tile=256, kv_tile=512, proj_tile=512):
    """x: (B, S, D); weights (D, D) pre-transposed; biases (1, D) or (D,)."""
    B, S, D = x.shape
    scale = 1.0 / math.sqrt(float(D))

    # Pad the feature dim to a multiple of 128 lanes. Zero padding keeps the
    # math exact: padded q/k columns are zero (no effect on the q.k
    # contraction) and padded v columns produce zero output columns, which are
    # stripped below.
    d_pad = max(128, ((D + 127) // 128) * 128)

    def pad_w(w, s=1.0):
        return jnp.pad(w * s, ((0, d_pad - D), (0, d_pad - D)))

    def pad_b(b, s=1.0):
        return jnp.pad(jnp.reshape(b, (1, -1)) * s, ((0, 0), (0, d_pad - D)))

    xp = jnp.pad(x, ((0, 0), (0, 0), (0, d_pad - D)))
    # Fused, pre-scaled QKV weights/biases: [Wq*scale | Wk | Wv], (Dp, 3*Dp).
    w_qkv = jnp.concatenate([pad_w(wq, scale), pad_w(wk), pad_w(wv)], axis=1)
    b_qkv = jnp.concatenate([pad_b(bq, scale), pad_b(bk), pad_b(bv)], axis=1)

    # -------- Stage 1: fused QKV projection --------
    tm = _pick_tile(S, proj_tile)
    qkv = pl.pallas_call(
        _qkv_projection_kernel,
        out_shape=jax.ShapeDtypeStruct((B, S, 3 * d_pad), x.dtype),
        grid_spec=pltpu.PrefetchScalarGridSpec(
            num_scalar_prefetch=0,
            grid=(B, S // tm),
            in_specs=[
                pl.BlockSpec((1, tm, d_pad), lambda b, i: (b, i, 0)),
                # Grid-invariant weights / biases (constant index maps).
                pl.BlockSpec((d_pad, 3 * d_pad), lambda b, i: (0, 0)),
                pl.BlockSpec((1, 3 * d_pad), lambda b, i: (0, 0)),
            ],
            out_specs=pl.BlockSpec((1, tm, 3 * d_pad), lambda b, i: (b, i, 0)),
        ),
        compiler_params=pltpu.CompilerParams(
            dimension_semantics=("parallel", "parallel"),
            vmem_limit_bytes=64 * 1024 * 1024,
        ),
    )(xp, w_qkv, b_qkv)

    # -------- Stage 2: flash-style tiled attention --------
    tq = _pick_tile(S, q_tile)
    tk = _pick_tile(S, kv_tile)
    grid = (B, S // tq, S // tk)

    out = pl.pallas_call(
        _flash_attention_kernel,
        out_shape=jax.ShapeDtypeStruct((B, S, d_pad), x.dtype),
        grid_spec=pltpu.PrefetchScalarGridSpec(
            num_scalar_prefetch=0,
            grid=grid,
            in_specs=[
                # Same qkv buffer, three lane-aligned 128-wide windows:
                # q = [:, :, 0:Dp], k = [:, :, Dp:2Dp], v = [:, :, 2Dp:3Dp].
                pl.BlockSpec((1, tq, d_pad), lambda b, qi, ki: (b, qi, 0)),
                pl.BlockSpec((1, tk, d_pad), lambda b, qi, ki: (b, ki, 1)),
                pl.BlockSpec((1, tk, d_pad), lambda b, qi, ki: (b, ki, 2)),
            ],
            out_specs=pl.BlockSpec((1, tq, d_pad), lambda b, qi, ki: (b, qi, 0)),
            scratch_shapes=[
                pltpu.VMEM((tq, 1), jnp.float32),       # running row max
                pltpu.VMEM((tq, 1), jnp.float32),       # running row denom
                pltpu.VMEM((tq, d_pad), jnp.float32),   # output accumulator
            ],
        ),
        compiler_params=pltpu.CompilerParams(
            dimension_semantics=("parallel", "parallel", "arbitrary"),
            vmem_limit_bytes=64 * 1024 * 1024,
        ),
    )(qkv, qkv, qkv)

    return out[..., :D]


def _reference(x, wq, bq, wk, bk, wv, bv):
    q = x @ wq + bq
    k = x @ wk + bk
    v = x @ wv + bv
    scores = jnp.einsum("bqd,bkd->bqk", q, k) / jnp.sqrt(
        jnp.float32(x.shape[-1]))
    w = jax.nn.softmax(scores, axis=-1)
    return jnp.einsum("bqk,bkd->bqd", w, v)


if __name__ == "__main__":
    B, S, D = 2, 8, 32  # batch, seq, input_dim
    key = jax.random.PRNGKey(0)
    kx, kq, kqb, kk, kkb, kv, kvb = jax.random.split(key, 7)

    x = jax.random.normal(kx, (B, S, D), dtype=jnp.float32)

    # Deterministic nn.Linear-style parameter init (uniform(-1/sqrt(D), 1/sqrt(D))).
    bound = 1.0 / math.sqrt(D)
    # Stored pre-transposed: (D_in, D_out).
    wq = jax.random.uniform(kq, (D, D), jnp.float32, -bound, bound)
    wk = jax.random.uniform(kk, (D, D), jnp.float32, -bound, bound)
    wv = jax.random.uniform(kv, (D, D), jnp.float32, -bound, bound)
    bq = jax.random.uniform(kqb, (1, D), jnp.float32, -bound, bound)
    bk = jax.random.uniform(kkb, (1, D), jnp.float32, -bound, bound)
    bv = jax.random.uniform(kvb, (1, D), jnp.float32, -bound, bound)

    out = self_attention(x, wq, bq, wk, bk, wv, bv)
    jax.block_until_ready(out)

    ref = _reference(x, wq, bq, wk, bk, wv, bv)
    assert out.shape == (B, S, D)
    # Tolerance loosened slightly vs 1e-5 because of the approximate (EUP)
    # reciprocal used for the softmax normalization.
    assert jnp.allclose(out, ref, atol=2e-3, rtol=2e-3), "mismatch vs reference"

    print("KERNEL_OK")
</pallas_src>

<mosaic_0001>
module attributes {stable_mosaic.version = 11 : i64} {
  func.func @_qkv_projection_kernel(%arg0: i32, %arg1: i32, %arg2: memref<1x8x128xf32, #tpu.memory_space<vmem>>, %arg3: memref<128x384xf32, #tpu.memory_space<vmem>>, %arg4: memref<1x384xf32, #tpu.memory_space<vmem>>, %arg5: memref<1x8x384xf32, #tpu.memory_space<vmem>>) attributes {dimension_semantics = [#tpu.dimension_semantics<parallel>, #tpu.dimension_semantics<parallel>], iteration_bounds = array<i64: 2, 1>, scalar_prefetch = 0 : i64, scratch_operands = 0 : i64, tpu.core_type = #tpu.core_type<tc>, window_params = [{transform_indices = @transform_0, window_bounds = array<i64: 1, 8, 128>}, {pipeline_mode = #tpu.pipeline_mode<synchronous>, transform_indices = @transform_1, window_bounds = array<i64: 128, 384>}, {pipeline_mode = #tpu.pipeline_mode<synchronous>, transform_indices = @transform_2, window_bounds = array<i64: 1, 384>}, {transform_indices = @transform_3, window_bounds = array<i64: 1, 8, 384>}]} {
    %c0 = arith.constant 0 : index
    %c0_0 = arith.constant 0 : index
    %c0_1 = arith.constant 0 : index
    %0 = vector.load %arg2[%c0, %c0_0, %c0_1] : memref<1x8x128xf32, #tpu.memory_space<vmem>>, vector<1x8x128xf32>
    %1 = vector.shape_cast %0 : vector<1x8x128xf32> to vector<8x128xf32>
    %c0_2 = arith.constant 0 : index
    %c0_3 = arith.constant 0 : index
    %2 = vector.load %arg3[%c0_2, %c0_3] : memref<128x384xf32, #tpu.memory_space<vmem>>, vector<128x384xf32>
    %cst = arith.constant dense<0.000000e+00> : vector<8x384xf32>
    %3 = tpu.matmul %1, %2, %cst {dimension_numbers = #tpu.dot_dimension_numbers<[1], [0], [0], [1], [0, 0, 1, 1], [], []>} : vector<8x128xf32>, vector<128x384xf32>, vector<8x384xf32> -> vector<8x384xf32>
    %c0_4 = arith.constant 0 : index
    %c0_5 = arith.constant 0 : index
    %4 = vector.load %arg4[%c0_4, %c0_5] : memref<1x384xf32, #tpu.memory_space<vmem>>, vector<1x384xf32>
    %5 = vector.broadcast %4 : vector<1x384xf32> to vector<8x384xf32>
    %6 = arith.addf %3, %5 : vector<8x384xf32>
    %c0_6 = arith.constant 0 : index
    %c0_7 = arith.constant 0 : index
    %c0_8 = arith.constant 0 : index
    %7 = vector.load %arg5[%c0_6, %c0_7, %c0_8] : memref<1x8x384xf32, #tpu.memory_space<vmem>>, vector<1x8x384xf32>
    %8 = vector.shape_cast %7 : vector<1x8x384xf32> to vector<8x384xf32>
    %9 = vector.shape_cast %6 : vector<8x384xf32> to vector<1x8x384xf32>
    tpu.vector_store %arg5[%c0_6, %c0_7, %c0_8], %9 {strides = array<i32>} : memref<1x8x384xf32, #tpu.memory_space<vmem>>, vector<1x8x384xf32>,
    return
  }
  func.func @transform_0(%arg0: i32, %arg1: i32) -> (i32, i32, i32) {
    %c0_i32 = arith.constant 0 : i32
    %c0_i32_0 = arith.constant 0 : i32
    return %arg0, %arg1, %c0_i32 : i32, i32, i32
  }
  func.func @transform_1(%arg0: i32, %arg1: i32) -> (i32, i32) {
    %c0_i32 = arith.constant 0 : i32
    %c0_i32_0 = arith.constant 0 : i32
    %c0_i32_1 = arith.constant 0 : i32
    return %c0_i32, %c0_i32_0 : i32, i32
  }
  func.func @transform_2(%arg0: i32, %arg1: i32) -> (i32, i32) {
    %c0_i32 = arith.constant 0 : i32
    %c0_i32_0 = arith.constant 0 : i32
    %c0_i32_1 = arith.constant 0 : i32
    return %c0_i32, %c0_i32_0 : i32, i32
  }
  func.func @transform_3(%arg0: i32, %arg1: i32) -> (i32, i32, i32) {
    %c0_i32 = arith.constant 0 : i32
    %c0_i32_0 = arith.constant 0 : i32
    return %arg0, %arg1, %c0_i32 : i32, i32, i32
  }
}

</mosaic_0001>

<llo_original>
// kernel: tpu_custom_call.1
$region0: #{tpu_custom_call.1}
  #allocation0 [shape = 'u32[]', space=smem, size = 0x4, offset = 0x4, fixed_abs, tag = 'smem constant byte address 0x4 - core index']
  #allocation1 [shape = 'u32[144,128]{1,0:T(1,128)}', space=vmem, size = 0x12000, scoped, tag = 'internal scratch']
  %s0 = inlined_call_operand.hbm [shape: f32[2,8,128], index: 0, kind: input, shape index: {}]
  %s1 = inlined_call_operand.hbm [shape: f32[128,384], index: 1, kind: input, shape index: {}]
  %s2 = inlined_call_operand.vmem [shape: f32[1,384], index: 2, kind: input, shape index: {}]
  %s3 = inlined_call_operand.hbm [shape: f32[2,8,384], index: 3, kind: output, shape index: {}]
  %s4 = sld [smem:[#allocation0]]
  $region53: #{tpu_custom_call.1} parent=0
    _
  %s6 = ssub.s32 1, %s4
  %s7 = scalar_select 0, %s6, %s4
  $region1: #{tpu_custom_call.1} parent=0
    #allocation2 [shape = 'u8[8192]{0}', space=vmem, size = 0x2000, scoped, tag = 'input window, operand 0']
    #allocation3 [shape = 's32[2]{0}', space=sflag, size = 0x8, scoped, tag = 'scoped memory for tpu_custom_call.1']
    #allocation4 [shape = 's32[2]{0}', space=sflag, size = 0x8, scoped, tag = 'scoped memory for tpu_custom_call.1']
    #allocation5 [shape = 'u8[196608]{0}', space=vmem, size = 0x30000, scoped, tag = 'input window, operand 1, single buffered']
    #allocation6 [shape = 's32[1]{0}', space=sflag, size = 0x4, scoped, tag = 'scoped memory for tpu_custom_call.1']
    #allocation7 [shape = 'u8[24576]{0}', space=vmem, size = 0x6000, scoped, tag = 'output window, operand 0']
    %8 = vsyncpa [#allocation3], 0
    %s9 = scalar_lea.sflag [#allocation3], 1
    %10 = vsyncpa %s9, 0
    %11 = vsyncpa [#allocation6], 0
    %12 = vsyncpa [#allocation4], 0
    %s13 = scalar_lea.sflag [#allocation4], 1
    %14 = vsyncpa %s13, 0
    loop: start=0, step=1, limit=4
    $region2: #{tpu_custom_call.1} parent=1 // loop_pre_header
      _
    $region3: #{tpu_custom_call.1} parent=1 // loop_header
      %s16 = sphi 0, %s20
      %p17 = scmp.ge.s32.totalorder %s16, 4
      %s23 = sphi 0, %s35
      %s24 = sphi 0, %s31
      %s25 = sphi 0, %s23
      %s26 = sphi 0, %s24
      %s27 = sphi 0, %s25
      %s28 = sphi 0, %s26
      %s40 = sphi 0, %s42
      %s43 = sphi 0, %s40
      %s44 = sphi 0, %s43
      %s60 = sphi 0, %s44
      %s64 = sphi 0, %s64
      %s66 = sphi 0, %s64
      %s67 = sphi 0, %s66
      %s81 = sphi 0, %s67
      %s85 = sphi 0, %s85
      %s87 = sphi 0, %s85
      %s88 = sphi 0, %s87
      %s102 = sphi 0, %s88
      %s110 = sphi 0, %s112
      %s113 = sphi 0, %s110
      %s114 = sphi 0, %s113
      %s130 = sphi 0, %s114
    $region4: #{tpu_custom_call.1} parent=1 // loop_header_branch
      %19 = sbr.rel (%p17) target = $region8
    $region5: #{tpu_custom_call.1} parent=1 // loop_body
      %s21 = ssub.s32 %s16, 1
      %s22 = ssub.s32 %s16, 2
      %s29 = sadd.s32 1, %s24
      %p30 = scmp.ge.s32.totalorder %s29, 1
      %s31 = scalar_select %p30, 0, %s29
      %s32 = sadd.s32 1, %s23
      %s33 = scalar_select %p30, %s32, %s23
      %p34 = scmp.ge.s32.totalorder %s33, 2
      %s35 = scalar_select %p34, 0, %s33
      %s36 = ssub.s32 %s23, %s35
      %s37 = ssub.s32 %s24, %s31
      %s38 = sor.u32 %s36, %s37
      %p39 = scmp.eq.s32.totalorder %s38, 0
      %s41 = sadd.s32 %s40, 1
      %s42 = scalar_select %p39, %s40, %s41
      %p45 = pneg %p39
      %p46 = scmp.eq.s32.totalorder %s16, 1
      %p47 = por %p45, %p46
      %p48 = scmp.ne.s32.totalorder %s40, %s43
      %p49 = scmp.eq.s32.totalorder %s16, 0
      %p50 = por %p48, %p49
      %p51 = scmp.ne.s32.totalorder %s40, %s43
      %p52 = scmp.eq.s32.totalorder %s21, 1
      %p53 = por %p51, %p52
      %p54 = scmp.ne.s32.totalorder %s43, %s44
      %p55 = scmp.eq.s32.totalorder %s21, 0
      %p56 = por %p54, %p55
      %p57 = scmp.ne.s32.totalorder %s43, %s44
      %p58 = scmp.eq.s32.totalorder %s22, 1
      %p59 = por %p57, %p58
      %p61 = scmp.ne.s32.totalorder %s44, %s60
      %p62 = scmp.eq.s32.totalorder %s22, 0
      %p63 = por %p61, %p62
      %s65 = sadd.s32 %s64, 1
      %p68 = scmp.eq.s32.totalorder %s16, 1
      %p69 = scmp.ne.s32.totalorder %s64, %s66
      %p70 = scmp.eq.s32.totalorder %s16, 0
      %p71 = por %p69, %p70
      %p72 = scmp.ne.s32.totalorder %s64, %s66
      %p73 = scmp.eq.s32.totalorder %s21, 1
      %p74 = por %p72, %p73
      %p75 = scmp.ne.s32.totalorder %s66, %s67
      %p76 = scmp.eq.s32.totalorder %s21, 0
      %p77 = por %p75, %p76
      %p78 = scmp.ne.s32.totalorder %s66, %s67
      %p79 = scmp.eq.s32.totalorder %s22, 1
      %p80 = por %p78, %p79
      %p82 = scmp.ne.s32.totalorder %s67, %s81
      %p83 = scmp.eq.s32.totalorder %s22, 0
      %p84 = por %p82, %p83
      %s86 = sadd.s32 %s85, 1
      %p89 = scmp.eq.s32.totalorder %s16, 1
      %p90 = scmp.ne.s32.totalorder %s85, %s87
      %p91 = scmp.eq.s32.totalorder %s16, 0
      %p92 = por %p90, %p91
      %p93 = scmp.ne.s32.totalorder %s85, %s87
      %p94 = scmp.eq.s32.totalorder %s21, 1
      %p95 = por %p93, %p94
      %p96 = scmp.ne.s32.totalorder %s87, %s88
      %p97 = scmp.eq.s32.totalorder %s21, 0
      %p98 = por %p96, %p97
      %p99 = scmp.ne.s32.totalorder %s87, %s88
      %p100 = scmp.eq.s32.totalorder %s22, 1
      %p101 = por %p99, %p100
      %p103 = scmp.ne.s32.totalorder %s88, %s102
      %p104 = scmp.eq.s32.totalorder %s22, 0
      %p105 = por %p103, %p104
      %s106 = ssub.s32 %s23, %s35
      %s107 = ssub.s32 %s24, %s31
      %s108 = sor.u32 %s106, %s107
      %p109 = scmp.eq.s32.totalorder %s108, 0
      %s111 = sadd.s32 %s110, 1
      %s112 = scalar_select %p109, %s110, %s111
      %p115 = pneg %p109
      %p116 = scmp.eq.s32.totalorder %s16, 1
      %p117 = por %p115, %p116
      %p118 = scmp.ne.s32.totalorder %s110, %s113
      %p119 = scmp.eq.s32.totalorder %s16, 0
      %p120 = por %p118, %p119
      %p121 = scmp.ne.s32.totalorder %s110, %s113
      %p122 = scmp.eq.s32.totalorder %s21, 1
      %p123 = por %p121, %p122
      %p124 = scmp.ne.s32.totalorder %s113, %s114
      %p125 = scmp.eq.s32.totalorder %s21, 0
      %p126 = por %p124, %p125
      %p127 = scmp.ne.s32.totalorder %s113, %s114
      %p128 = scmp.eq.s32.totalorder %s22, 1
      %p129 = por %p127, %p128
      %p131 = scmp.ne.s32.totalorder %s114, %s130
      %p132 = scmp.eq.s32.totalorder %s22, 0
      %p133 = por %p131, %p132
      %p134 = scmp.le.s32.totalorder 1, %s16
      %p135 = scmp.lt.s32.totalorder %s16, 3
      %p136 = pnand %p134, %p135
      %p137 = pneg %p136
      // Predicated region
      $region9: #{tpu_custom_call.1} parent=5 // pred_check
        _
      $region10: #{tpu_custom_call.1} parent=5 // pred_check_branch
        %139 = sbr.rel (%p136) target = $region12
      $region11: #{tpu_custom_call.1} parent=5 // pred_region
        %s140 = ssub.s32 %s16, 1
        // Predicated region
        $region13: #{tpu_custom_call.1} parent=11 // pred_check
          %p141 = pneg %p77
        $region14: #{tpu_custom_call.1} parent=11 // pred_check_branch
          %143 = sbr.rel (%p141) target = $region16
        $region15: #{tpu_custom_call.1} parent=11 // pred_region
          %s145 = ssub.s32 6144, 6144
          %146 = vsyncadd [#allocation6], %s145
          %s147 = sshll.u32 [#allocation5], 4
          %s148 = int_to_ptr.vmem [resolvable:$true] %s147
          %153 = dma.hbm_to_vmem [thread:$0]  %s1, 6144, %s148, [#allocation6], 384, 384, 24
        $region16: #{tpu_custom_call.1} parent=11 // pred_fallthru
          _
        // Predicated region
        $region17: #{tpu_custom_call.1} parent=11 // pred_check
          %p154 = pneg %p98
        $region18: #{tpu_custom_call.1} parent=11 // pred_check_branch
          %156 = sbr.rel (%p154) target = $region20
        $region19: #{tpu_custom_call.1} parent=11 // pred_region
          _
        $region20: #{tpu_custom_call.1} parent=11 // pred_fallthru
          _
      $region12: #{tpu_custom_call.1} parent=5 // pred_fallthru
        _
      %p157 = scmp.lt.s32.totalorder %s16, 2
      // Predicated region
      $region21: #{tpu_custom_call.1} parent=5 // pred_check
        %p158 = pneg %p157
      $region22: #{tpu_custom_call.1} parent=5 // pred_check_branch
        %160 = sbr.rel (%p158) target = $region24
      $region23: #{tpu_custom_call.1} parent=5 // pred_region
        // Predicated region
        $region25: #{tpu_custom_call.1} parent=23 // pred_check
          %p161 = pneg %p50
        $region26: #{tpu_custom_call.1} parent=23 // pred_check_branch
          %163 = sbr.rel (%p161) target = $region28
        $region27: #{tpu_custom_call.1} parent=23 // pred_region
          %s164 = sand.u32 %s40, 1
          %s165 = scalar_lea.sflag [#allocation3], %s164
          %s166 = sand.u32 %s40, 1
          %s167 = smul.addr %s166, 8
          %s168 = scalar_lea.vmem [#allocation2], %s167
          %s170 = ssub.s32 128, 128
          %171 = vsyncadd %s165, %s170
          %s172 = sadd.s32 %s24, %s23
          %s173 = smul.addr %s172, 128
          %s174 = scalar_lea.hbm %s0, %s173
          %s176 = sshll.u32 %s168, 4
          %s177 = int_to_ptr.vmem [resolvable:$true] %s176
          %179 = dma.hbm_to_vmem [thread:$0]  %s174, 128, %s177, %s165
        $region28: #{tpu_custom_call.1} parent=23 // pred_fallthru
          _
      $region24: #{tpu_custom_call.1} parent=5 // pred_fallthru
        _
      %p180 = scmp.le.s32.totalorder 1, %s16
      %p181 = scmp.lt.s32.totalorder %s16, 3
      %p182 = pnand %p180, %p181
      %p183 = pneg %p182
      // Predicated region
      $region29: #{tpu_custom_call.1} parent=5 // pred_check
        _
      $region30: #{tpu_custom_call.1} parent=5 // pred_check_branch
        %185 = sbr.rel (%p182) target = $region32
      $region31: #{tpu_custom_call.1} parent=5 // pred_region
        %s186 = ssub.s32 %s16, 1
        %s187 = sand.u32 %s43, 1
        %s188 = scalar_lea.sflag [#allocation3], %s187
        %s189 = sand.u32 %s43, 1
        %s190 = smul.addr %s189, 8
        %s191 = scalar_lea.vmem [#allocation2], %s190
        // Predicated region
        $region33: #{tpu_custom_call.1} parent=31 // pred_check
          %p192 = pneg %p56
        $region34: #{tpu_custom_call.1} parent=31 // pred_check_branch
          %194 = sbr.rel (%p192) target = $region36
        $region35: #{tpu_custom_call.1} parent=31 // pred_region
          %195 = dma.done %s188, 128
        $region36: #{tpu_custom_call.1} parent=31 // pred_fallthru
          _
        // Predicated region
        $region37: #{tpu_custom_call.1} parent=31 // pred_check
          %p196 = pneg %p77
        $region38: #{tpu_custom_call.1} parent=31 // pred_check_branch
          %198 = sbr.rel (%p196) target = $region40
        $region39: #{tpu_custom_call.1} parent=31 // pred_region
          %199 = dma.done [#allocation6], 6144
        $region40: #{tpu_custom_call.1} parent=31 // pred_fallthru
          _
        %s200 = sand.u32 %s43, 1
        %s201 = scalar_lea.sflag [#allocation3], %s200
        %s202 = sand.u32 %s43, 1
        %s203 = smul.addr %s202, 8
        %s204 = scalar_lea.vmem [#allocation2], %s203
        %p205 = pneg %p56
        %p206 = pneg %p53
        %p207 = pneg %p77
        %p208 = pneg %p74
        %p209 = pneg %p98
        %p210 = pneg %p95
        %p211 = pneg %p126
        %p212 = pneg %p123
        %s213 = sand.u32 %s113, 1
        %s214 = scalar_lea.sflag [#allocation4], %s213
        %s215 = sand.u32 %s113, 1
        %s216 = smul.addr %s215, 24
        %s217 = scalar_lea.vmem [#allocation7], %s216
        %v218 = vld [vmem:[%s191] sm:$0xff]
        %v219 = vld [vmem:[#allocation5] sm:$0xff]
        %v220 = vld [vmem:[#allocation5 + $0x8] sm:$0xff]
        %v221 = vld [vmem:[#allocation5 + $0x10] sm:$0xff]
        %v222 = vld [vmem:[#allocation5 + $0x18] sm:$0xff]
        %v223 = vld [vmem:[#allocation5 + $0x20] sm:$0xff]
        %v224 = vld [vmem:[#allocation5 + $0x28] sm:$0xff]
        %v225 = vld [vmem:[#allocation5 + $0x30] sm:$0xff]
        %v226 = vld [vmem:[#allocation5 + $0x38] sm:$0xff]
        %v227 = vld [vmem:[#allocation5 + $0x40] sm:$0xff]
        %v228 = vld [vmem:[#allocation5 + $0x48] sm:$0xff]
        %v229 = vld [vmem:[#allocation5 + $0x50] sm:$0xff]
        %v230 = vld [vmem:[#allocation5 + $0x58] sm:$0xff]
        %v231 = vld [vmem:[#allocation5 + $0x60] sm:$0xff]
        %v232 = vld [vmem:[#allocation5 + $0x68] sm:$0xff]
        %v233 = vld [vmem:[#allocation5 + $0x70] sm:$0xff]
        %v234 = vld [vmem:[#allocation5 + $0x78] sm:$0xff]
        %v235 = vld [vmem:[#allocation5 + $0x80] sm:$0xff]
        %v236 = vld [vmem:[#allocation5 + $0x88] sm:$0xff]
        %v237 = vld [vmem:[#allocation5 + $0x90] sm:$0xff]
        %v238 = vld [vmem:[#allocation5 + $0x98] sm:$0xff]
        %v239 = vld [vmem:[#allocation5 + $0xa0] sm:$0xff]
        %v240 = vld [vmem:[#allocation5 + $0xa8] sm:$0xff]
        %v241 = vld [vmem:[#allocation5 + $0xb0] sm:$0xff]
        %v242 = vld [vmem:[#allocation5 + $0xb8] sm:$0xff]
        %v243 = vld [vmem:[#allocation5 + $0xc0] sm:$0xff]
        %v244 = vld [vmem:[#allocation5 + $0xc8] sm:$0xff]
        %v245 = vld [vmem:[#allocation5 + $0xd0] sm:$0xff]
        %v246 = vld [vmem:[#allocation5 + $0xd8] sm:$0xff]
        %v247 = vld [vmem:[#allocation5 + $0xe0] sm:$0xff]
        %v248 = vld [vmem:[#allocation5 + $0xe8] sm:$0xff]
        %v249 = vld [vmem:[#allocation5 + $0xf0] sm:$0xff]
        %v250 = vld [vmem:[#allocation5 + $0xf8] sm:$0xff]
        %v251 = vld [vmem:[#allocation5 + $0x100] sm:$0xff]
        %v252 = vld [vmem:[#allocation5 + $0x108] sm:$0xff]
        %v253 = vld [vmem:[#allocation5 + $0x110] sm:$0xff]
        %v254 = vld [vmem:[#allocation5 + $0x118] sm:$0xff]
        %v255 = vld [vmem:[#allocation5 + $0x120] sm:$0xff]
        %v256 = vld [vmem:[#allocation5 + $0x128] sm:$0xff]
        %v257 = vld [vmem:[#allocation5 + $0x130] sm:$0xff]
        %v258 = vld [vmem:[#allocation5 + $0x138] sm:$0xff]
        %v259 = vld [vmem:[#allocation5 + $0x140] sm:$0xff]
        %v260 = vld [vmem:[#allocation5 + $0x148] sm:$0xff]
        %v261 = vld [vmem:[#allocation5 + $0x150] sm:$0xff]
        %v262 = vld [vmem:[#allocation5 + $0x158] sm:$0xff]
        %v263 = vld [vmem:[#allocation5 + $0x160] sm:$0xff]
        %v264 = vld [vmem:[#allocation5 + $0x168] sm:$0xff]
        %v265 = vld [vmem:[#allocation5 + $0x170] sm:$0xff]
        %v266 = vld [vmem:[#allocation5 + $0x178] sm:$0xff]
        %v267 = vld [vmem:[%s2] sm:$0x7]
        %v269 = vlaneseq
        %v270 = vshrl.u32 %v269, 7
        %v271 = vsub.s32 0, %v270
        %v272 = vrot.slane %v267, %v271
        %v273 = vlaneseq
        %v274 = vshrl.u32 %v273, 7
        %v275 = vsub.s32 1, %v274
        %v276 = vrot.slane %v267, %v275
        %v277 = vlaneseq
        %v278 = vshrl.u32 %v277, 7
        %v279 = vsub.s32 2, %v278
        %v280 = vrot.slane %v267, %v279
        %284 = vmatprep.subr.mxu0 %v265
        %285 = vmatpush1.msra.mxu0 %v264
        %286 = vmatprep.subr.mxu0 %v262
        %287 = vmatpush1.msra.mxu0 %v261
        %288 = vmatprep.subr.mxu0 %v259
        %289 = vmatpush1.msra.mxu0 %v258
        %290 = vmatprep.subr.mxu0 %v256
        %291 = vmatpush1.msra.mxu0 %v255
        %292 = vmatprep.subr.mxu0 %v253
        %293 = vmatpush1.msra.mxu0 %v252
        %294 = vmatprep.subr.mxu0 %v250
        %295 = vmatpush1.msra.mxu0 %v249
        %296 = vmatprep.subr.mxu0 %v247
        %297 = vmatpush1.msra.mxu0 %v246
        %298 = vmatprep.subr.mxu0 %v244
        %299 = vmatpush1.msra.mxu0 %v243
        %300 = vmatprep.subr.mxu0 %v241
        %301 = vmatpush1.msra.mxu0 %v240
        %302 = vmatprep.subr.mxu0 %v238
        %303 = vmatpush1.msra.mxu0 %v237
        %304 = vmatprep.subr.mxu0 %v235
        %305 = vmatpush1.msra.mxu0 %v234
        %306 = vmatprep.subr.mxu0 %v232
        %307 = vmatpush1.msra.mxu0 %v231
        %308 = vmatprep.subr.mxu0 %v229
        %309 = vmatpush1.msra.mxu0 %v228
        %310 = vmatprep.subr.mxu0 %v226
        %311 = vmatpush1.msra.mxu0 %v225
        %312 = vmatprep.subr.mxu0 %v223
        %313 = vmatpush1.msra.mxu0 %v222
        %314 = vmatprep.subr.mxu0 %v220
        %315 = vmatpush1.msra.mxu0 %v219
        %316 = vmatprep.subr.mxu0 0.0
        %317 = vmatpush2.msra.mxu0 0.0
        %318 = vmatprep.subr.mxu0 0.0
        %319 = vmatpush2.msra.mxu0 0.0
        %320 = vmatprep.subr.mxu0 0.0
        %321 = vmatpush2.msra.mxu0 0.0
        %322 = vmatprep.subr.mxu0 0.0
        %323 = vmatpush2.msra.mxu0 0.0
        %324 = vmatprep.subr.mxu0 0.0
        %325 = vmatpush2.msra.mxu0 0.0
        %326 = vmatprep.subr.mxu0 0.0
        %327 = vmatpush2.msra.mxu0 0.0
        %328 = vmatprep.subr.mxu0 0.0
        %329 = vmatpush2.msra.mxu0 0.0
        %330 = vmatprep.subr.mxu0 0.0
        %331 = vmatpush2.msra.mxu0 0.0
        %332 = vmatprep.subr.mxu0 0.0
        %333 = vmatpush2.msra.mxu0 0.0
        %334 = vmatprep.subr.mxu0 0.0
        %335 = vmatpush2.msra.mxu0 0.0
        %336 = vmatprep.subr.mxu0 0.0
        %337 = vmatpush2.msra.mxu0 0.0
        %338 = vmatprep.subr.mxu0 0.0
        %339 = vmatpush2.msra.mxu0 0.0
        %340 = vmatprep.subr.mxu0 0.0
        %341 = vmatpush2.msra.mxu0 0.0
        %342 = vmatprep.subr.mxu0 0.0
        %343 = vmatpush2.msra.mxu0 0.0
        %344 = vmatprep.subr.mxu0 0.0
        %345 = vmatpush2.msra.mxu0 0.0
        %346 = vmatprep.subr.mxu0 0.0
        %347 = vmatpush2.msra.mxu0 0.0
        %348 = vmatprep.mubr.f32.mxu0 0.0
        %349 = vmatmul.mubr.f32.gmra.mxu0 %v218
        %v350 = vpop.f32.mrf.mxu0
        %v351 = vadd.f32 %v272, %v350
        %v352 = vpop.f32.mrf.mxu0
        %v353 = vadd.f32 %v276, %v352
        %354 = vdwg.mxu0
        %355 = vmatprep.subr.mxu0 0.0
        %356 = vmatpush1.msra.mxu0 %v266
        %357 = vmatprep.subr.mxu0 0.0
        %358 = vmatpush1.msra.mxu0 %v263
        %359 = vmatprep.subr.mxu0 0.0
        %360 = vmatpush1.msra.mxu0 %v260
        %361 = vmatprep.subr.mxu0 0.0
        %362 = vmatpush1.msra.mxu0 %v257
        %363 = vmatprep.subr.mxu0 0.0
        %364 = vmatpush1.msra.mxu0 %v254
        %365 = vmatprep.subr.mxu0 0.0
        %366 = vmatpush1.msra.mxu0 %v251
        %367 = vmatprep.subr.mxu0 0.0
        %368 = vmatpush1.msra.mxu0 %v248
        %369 = vmatprep.subr.mxu0 0.0
        %370 = vmatpush1.msra.mxu0 %v245
        %371 = vmatprep.subr.mxu0 0.0
        %372 = vmatpush1.msra.mxu0 %v242
        %373 = vmatprep.subr.mxu0 0.0
        %374 = vmatpush1.msra.mxu0 %v239
        %375 = vmatprep.subr.mxu0 0.0
        %376 = vmatpush1.msra.mxu0 %v236
        %377 = vmatprep.subr.mxu0 0.0
        %378 = vmatpush1.msra.mxu0 %v233
        %379 = vmatprep.subr.mxu0 0.0
        %380 = vmatpush1.msra.mxu0 %v230
        %381 = vmatprep.subr.mxu0 0.0
        %382 = vmatpush1.msra.mxu0 %v227
        %383 = vmatprep.subr.mxu0 0.0
        %384 = vmatpush1.msra.mxu0 %v224
        %385 = vmatprep.subr.mxu0 0.0
        %386 = vmatpush1.msra.mxu0 %v221
        %387 = vmatprep.subr.mxu0 0.0
        %388 = vmatpush2.msra.mxu0 0.0
        %389 = vmatprep.subr.mxu0 0.0
        %390 = vmatpush2.msra.mxu0 0.0
        %391 = vmatprep.subr.mxu0 0.0
        %392 = vmatpush2.msra.mxu0 0.0
        %393 = vmatprep.subr.mxu0 0.0
        %394 = vmatpush2.msra.mxu0 0.0
        %395 = vmatprep.subr.mxu0 0.0
        %396 = vmatpush2.msra.mxu0 0.0
        %397 = vmatprep.subr.mxu0 0.0
        %398 = vmatpush2.msra.mxu0 0.0
        %399 = vmatprep.subr.mxu0 0.0
        %400 = vmatpush2.msra.mxu0 0.0
        %401 = vmatprep.subr.mxu0 0.0
        %402 = vmatpush2.msra.mxu0 0.0
        %403 = vmatprep.subr.mxu0 0.0
        %404 = vmatpush2.msra.mxu0 0.0
        %405 = vmatprep.subr.mxu0 0.0
        %406 = vmatpush2.msra.mxu0 0.0
        %407 = vmatprep.subr.mxu0 0.0
        %408 = vmatpush2.msra.mxu0 0.0
        %409 = vmatprep.subr.mxu0 0.0
        %410 = vmatpush2.msra.mxu0 0.0
        %411 = vmatprep.subr.mxu0 0.0
        %412 = vmatpush2.msra.mxu0 0.0
        %413 = vmatprep.subr.mxu0 0.0
        %414 = vmatpush2.msra.mxu0 0.0
        %415 = vmatprep.subr.mxu0 0.0
        %416 = vmatpush2.msra.mxu0 0.0
        %417 = vmatprep.subr.mxu0 0.0
        %418 = vmatpush2.msra.mxu0 0.0
        %419 = vmatprep.mubr.f32.mxu0 0.0
        %420 = vmatmul.mubr.f32.gmra.mxu0 %v218
        %v421 = vpop.f32.mrf.mxu0
        %v422 = vadd.f32 %v280, %v421
        %v423 = vpop.f32.mrf.mxu0
        %424 = vdwg.mxu0
        %425 = vst [vmem:[%s217] sm:$0xff] %v351
        %426 = vst [vmem:[%s217 + $0x8] sm:$0xff] %v353
        %427 = vst [vmem:[%s217 + $0x10] sm:$0xff] %v422
        %s428 = sand.u32 %s113, 1
        %s429 = scalar_lea.sflag [#allocation4], %s428
        %s430 = sand.u32 %s113, 1
        %s431 = smul.addr %s430, 24
        %s432 = scalar_lea.vmem [#allocation7], %s431
        // Predicated region
        $region41: #{tpu_custom_call.1} parent=31 // pred_check
          %p433 = pneg %p123
        $region42: #{tpu_custom_call.1} parent=31 // pred_check_branch
          %435 = sbr.rel (%p433) target = $region44
        $region43: #{tpu_custom_call.1} parent=31 // pred_region
          %s437 = ssub.s32 384, 384
          %438 = vsyncadd %s429, %s437
          %s439 = smul.addr %s26, 3
          %s440 = smul.addr %s25, 3
          %s441 = sadd.s32 %s439, %s440
          %s442 = smul.addr %s441, 128
          %s443 = scalar_lea.hbm %s3, %s442
          %s445 = sshll.u32 %s432, 4
          %s446 = int_to_ptr.vmem [resolvable:$true] %s445
          %448 = dma.vmem_to_hbm [thread:$0]  %s446, 384, %s443, %s429
        $region44: #{tpu_custom_call.1} parent=31 // pred_fallthru
          _
      $region32: #{tpu_custom_call.1} parent=5 // pred_fallthru
        _
      %p449 = scmp.le.s32.totalorder 2, %s16
      // Predicated region
      $region45: #{tpu_custom_call.1} parent=5 // pred_check
        %p450 = pneg %p449
      $region46: #{tpu_custom_call.1} parent=5 // pred_check_branch
        %452 = sbr.rel (%p450) target = $region48
      $region47: #{tpu_custom_call.1} parent=5 // pred_region
        %s453 = ssub.s32 %s16, 2
        // Predicated region
        $region49: #{tpu_custom_call.1} parent=47 // pred_check
          %p454 = pneg %p129
        $region50: #{tpu_custom_call.1} parent=47 // pred_check_branch
          %456 = sbr.rel (%p454) target = $region52
        $region51: #{tpu_custom_call.1} parent=47 // pred_region
          %s457 = sand.u32 %s114, 1
          %s458 = scalar_lea.sflag [#allocation4], %s457
          %s459 = sand.u32 %s114, 1
          %s460 = smul.addr %s459, 24
          %s461 = scalar_lea.vmem [#allocation7], %s460
          %462 = dma.done %s458, 384
        $region52: #{tpu_custom_call.1} parent=47 // pred_fallthru
          _
      $region48: #{tpu_custom_call.1} parent=5 // pred_fallthru
        _
    $region6: #{tpu_custom_call.1} parent=1 // loop_footer
      %s20 = sadd.s32 1, %s16
    $region7: #{tpu_custom_call.1} parent=1 // loop_footer_branch
      %15 = sbr.rel target = $region3
    $region8: #{tpu_custom_call.1} parent=1 // loop_exit
      _
    %463 = vsyncpa [#allocation3], 1
    %s464 = scalar_lea.sflag [#allocation3], 1
    %465 = vsyncpa %s464, 1
    %466 = vsyncpa [#allocation6], 1
    %467 = vsyncpa [#allocation4], 1
    %s468 = scalar_lea.sflag [#allocation4], 1
    %469 = vsyncpa %s468, 1

</llo_original>
